<compile_context>
chip_gen: v5e
topology: v5e:2x2
jax: 0.10.0
libtpu: 0.0.40
codegen_flags: <defaults>
</compile_context>

<pallas_src>
from __future__ import annotations

import dataclasses
import functools
import math

import jax
import jax.numpy as jnp
from jax.experimental import pallas as pl
from jax.experimental.pallas import tpu as pltpu


def _round_up(x, m):
    return ((x + m - 1) // m) * m


# ----------------------------- kernels -------------------------------------


def _fold_kernel_bias(x_ref, w_ref, b_ref, out_ref):
    # x:[TN, K*Din] @ w:[K*Din, Dp] (+ bias) -> out:[TN, Dp]   (mean folded into w)
    acc = jnp.dot(x_ref[...], w_ref[...], preferred_element_type=jnp.float32)
    out_ref[...] = (acc + b_ref[...]).astype(out_ref.dtype)


def _fold_kernel_nobias(x_ref, w_ref, out_ref):
    out_ref[...] = jnp.dot(
        x_ref[...], w_ref[...], preferred_element_type=jnp.float32
    ).astype(out_ref.dtype)


def _sum_kernel_bias(x_ref, w_ref, b_ref, out_ref, *, k, din):
    # VPU sum of K lane-aligned slices (requires Din % 128 == 0), then one matmul
    # against the un-replicated (already 1/K-scaled) weight.
    s = x_ref[:, 0:din]
    for kk in range(1, k):
        s = s + x_ref[:, kk * din:(kk + 1) * din]
    acc = jnp.dot(s, w_ref[...], preferred_element_type=jnp.float32)
    out_ref[...] = (acc + b_ref[...]).astype(out_ref.dtype)


def _sum_kernel_nobias(x_ref, w_ref, out_ref, *, k, din):
    s = x_ref[:, 0:din]
    for kk in range(1, k):
        s = s + x_ref[:, kk * din:(kk + 1) * din]
    out_ref[...] = jnp.dot(
        s, w_ref[...], preferred_element_type=jnp.float32
    ).astype(out_ref.dtype)


# --------------------------- parameter prep ---------------------------------


@dataclasses.dataclass
class MPParams:
    w: jax.Array            # [K*Din, Dp] (fold) or [Din, Dp] (sum); includes 1/K
    b: jax.Array | None     # [1, Dp] or None
    K: int
    Din: int
    Dout: int
    Dp: int
    use_sum: bool


def prepare_params(weight, bias, num_neighbors, x_dtype=jnp.float32):
    """One-time weight/bias preparation (hoist out of the per-call path)."""
    K = int(num_neighbors)
    Din, Dout = weight.shape
    Dp = _round_up(Dout, 128)                      # lane-dense output
    use_sum = (K > 1) and (Din % 128 == 0)         # in-kernel VPU mean is valid
    w = weight.astype(jnp.float32) * (1.0 / K)     # fold the mean's 1/K into w
    if not use_sum:
        w = jnp.tile(w, (K, 1))                    # [K*Din, Dout]
    if Dp != Dout:
        w = jnp.pad(w, ((0, 0), (0, Dp - Dout)))
    if jnp.dtype(x_dtype) == jnp.dtype(jnp.bfloat16):
        w = w.astype(jnp.bfloat16)                 # keep bf16 operands on the MXU
    b = None
    if bias is not None:
        b = jnp.zeros((1, Dp), jnp.float32).at[0, :Dout].set(bias.astype(jnp.float32))
    return MPParams(w=w, b=b, K=K, Din=Din, Dout=Dout, Dp=Dp, use_sum=use_sum)


# ------------------------------ forward -------------------------------------


def message_passing(neighbor_feature, weight=None, bias=None, *, params=None,
                    tile_rows=None):
    """Pallas forward of MessagePassing.

    neighbor_feature: [N, K, Din]
    weight: [Din, Dout] (ignored if `params` given), bias: [Dout] or None
    returns: [N, Dout] float32
    """
    N, K, Din = neighbor_feature.shape
    if params is None:
        params = prepare_params(weight, bias, K, neighbor_feature.dtype)
    assert params.K == K and params.Din == Din, "prepared params shape mismatch"

    KDin = K * Din
    Dp = params.Dp
    x = neighbor_feature.reshape(N, KDin)          # contiguous reshape; free in XLA
    x_itemsize = jnp.dtype(x.dtype).itemsize

    # ---- generation-aware VMEM budget ----
    try:
        vmem_cap = int(pltpu.get_tpu_info().vmem_capacity_bytes)
    except Exception:
        vmem_cap = 64 << 20                        # conservative fallback
    vmem_budget = int(0.75 * vmem_cap)             # headroom for Mosaic scratch

    # ---- tile over N (bytes-based, generation-aware) ----
    row_in_bytes = KDin * x_itemsize
    row_out_bytes = Dp * 4
    target_bytes = (2 << 20) if vmem_cap <= (64 << 20) else (4 << 20)
    if tile_rows is None:
        tn = max(256, min(4096, target_bytes // max(row_in_bytes, 1)))
        tn = (tn // 256) * 256                     # clean MXU M tiling
    else:
        tn = max(8, _round_up(int(tile_rows), 8))
    tn = min(tn, _round_up(N, 8))                  # don't over-allocate tiny problems

    w_bytes = int(params.w.size) * jnp.dtype(params.w.dtype).itemsize
    fixed_bytes = w_bytes + (Dp * 4 if params.b is not None else 0) + (4 << 20)
    while tn > 8 and 2 * tn * (row_in_bytes + row_out_bytes) + fixed_bytes > vmem_budget:
        tn = max(8, ((tn // 2) // 8) * 8)

    vmem_needed = 2 * tn * (row_in_bytes + row_out_bytes) + fixed_bytes
    vmem_limit = int(min(max(vmem_needed, 32 << 20), vmem_budget))

    # Ragged last block handled by Pallas: no wrapper-side pad, no row slice.
    grid = (pl.cdiv(N, tn),)

    wk = params.w.shape[0]                         # K*Din (fold) or Din (sum)
    in_specs = [
        pl.BlockSpec((tn, KDin), lambda i: (i, 0)),                    # streamed x
        pl.BlockSpec((wk, Dp), lambda i: (0, 0),
                     pipeline_mode=pl.Buffered(1)),                    # resident w
    ]
    args = [x, params.w]
    if params.b is not None:
        in_specs.append(pl.BlockSpec((1, Dp), lambda i: (0, 0),
                                     pipeline_mode=pl.Buffered(1)))    # resident b
        args.append(params.b)

    if params.use_sum:
        base = _sum_kernel_bias if params.b is not None else _sum_kernel_nobias
        kernel = functools.partial(base, k=K, din=Din)
        flops = 2 * N * Din * Dp + N * (K - 1) * Din
    else:
        kernel = _fold_kernel_bias if params.b is not None else _fold_kernel_nobias
        flops = 2 * N * KDin * Dp

    bytes_accessed = (N * row_in_bytes + w_bytes + N * row_out_bytes
                      + (Dp * 4 if params.b is not None else 0))

    out = pl.pallas_call(
        kernel,
        out_shape=jax.ShapeDtypeStruct((N, Dp), jnp.float32),
        grid_spec=pltpu.PrefetchScalarGridSpec(
            num_scalar_prefetch=0,
            grid=grid,
            in_specs=in_specs,
            out_specs=pl.BlockSpec((tn, Dp), lambda i: (i, 0)),
        ),
        compiler_params=pltpu.CompilerParams(
            # NOTE: on v7x, verify in xprof that both TensorCores are engaged; if
            # not, switch this axis to pltpu.CORE_PARALLEL / explicit core_map.
            dimension_semantics=("parallel",),
            vmem_limit_bytes=vmem_limit,
        ),
        cost_estimate=pl.CostEstimate(
            flops=flops, transcendentals=0, bytes_accessed=bytes_accessed),
    )(*args)

    # Column slice only when Dout had to be lane-padded; never a row slice.
    return out if Dp == params.Dout else out[:, :params.Dout]


def init_params(key, input_dim, output_dim, use_bias=True):
    """Deterministic xavier_uniform_ weight + zero bias (matches reset_parameters)."""
    bound = math.sqrt(6.0 / (input_dim + output_dim))
    weight = jax.random.uniform(
        key, (input_dim, output_dim), dtype=jnp.float32, minval=-bound, maxval=bound
    )
    bias = jnp.zeros((output_dim,), dtype=jnp.float32) if use_bias else None
    return weight, bias


if __name__ == "__main__":
    key = jax.random.PRNGKey(0)
    k1, k2, k3, kw1, kw2, kw3 = jax.random.split(key, 6)

    # Case 1: fold path (Din not lane-aligned), bias, Dout already a multiple of 128
    # (no column slice), single full tile.
    N, K, Din, Dout = 64, 4, 32, 128
    nf = jax.random.normal(k1, (N, K, Din), dtype=jnp.float32)
    w, b = init_params(kw1, Din, Dout, use_bias=True)
    out = jax.block_until_ready(message_passing(nf, w, b))
    ref = jnp.mean(nf, axis=1) @ w + b
    assert out.shape == (N, Dout)
    assert jnp.allclose(out, ref, atol=1e-3, rtol=1e-3)

    # Case 2: in-kernel VPU-sum path (Din % 128 == 0), no bias, forced multi-tile
    # ragged grid (N % tn != 0), padded Dout.
    N2, K2, Din2, Dout2 = 50, 8, 128, 64
    nf2 = jax.random.normal(k2, (N2, K2, Din2), dtype=jnp.float32)
    w2, _ = init_params(kw2, Din2, Dout2, use_bias=False)
    out2 = jax.block_until_ready(message_passing(nf2, w2, None, tile_rows=16))
    ref2 = jnp.mean(nf2, axis=1) @ w2
    assert out2.shape == (N2, Dout2)
    assert jnp.allclose(out2, ref2, atol=1e-3, rtol=1e-3)

    # Case 3: hoisted parameter prep reused across calls + partial single block
    # (N not a multiple of 8, Dout padded).
    N3, K3, Din3, Dout3 = 37, 4, 32, 64
    w3, b3 = init_params(kw3, Din3, Dout3, use_bias=True)
    prepared = prepare_params(w3, b3, num_neighbors=K3, x_dtype=jnp.float32)
    nf3 = jax.random.normal(k3, (N3, K3, Din3), dtype=jnp.float32)
    out3 = jax.block_until_ready(message_passing(nf3, params=prepared))
    ref3 = jnp.mean(nf3, axis=1) @ w3 + b3
    assert out3.shape == (N3, Dout3)
    assert jnp.allclose(out3, ref3, atol=1e-3, rtol=1e-3)

    print("KERNEL_OK")
</pallas_src>

<mosaic_0001>
module attributes {stable_mosaic.version = 11 : i64} {
  func.func @_fold_kernel_bias(%arg0: i32, %arg1: memref<64x128xf32, #tpu.memory_space<vmem>>, %arg2: memref<128x128xf32, #tpu.memory_space<vmem>>, %arg3: memref<1x128xf32, #tpu.memory_space<vmem>>, %arg4: memref<64x128xf32, #tpu.memory_space<vmem>>) attributes {dimension_semantics = [#tpu.dimension_semantics<parallel>], iteration_bounds = array<i64: 1>, scalar_prefetch = 0 : i64, scratch_operands = 0 : i64, tpu.core_type = #tpu.core_type<tc>, window_params = [{transform_indices = @transform_0, window_bounds = array<i64: 64, 128>}, {pipeline_mode = #tpu.pipeline_mode<synchronous>, transform_indices = @transform_1, window_bounds = array<i64: 128, 128>}, {pipeline_mode = #tpu.pipeline_mode<synchronous>, transform_indices = @transform_2, window_bounds = array<i64: 1, 128>}, {transform_indices = @transform_3, window_bounds = array<i64: 64, 128>}]} {
    %c0 = arith.constant 0 : index
    %c0_0 = arith.constant 0 : index
    %0 = vector.load %arg1[%c0, %c0_0] : memref<64x128xf32, #tpu.memory_space<vmem>>, vector<64x128xf32>
    %c0_1 = arith.constant 0 : index
    %c0_2 = arith.constant 0 : index
    %1 = vector.load %arg2[%c0_1, %c0_2] : memref<128x128xf32, #tpu.memory_space<vmem>>, vector<128x128xf32>
    %cst = arith.constant dense<0.000000e+00> : vector<64x128xf32>
    %2 = tpu.matmul %0, %1, %cst {dimension_numbers = #tpu.dot_dimension_numbers<[1], [0], [0], [1], [0, 0, 1, 1], [], []>} : vector<64x128xf32>, vector<128x128xf32>, vector<64x128xf32> -> vector<64x128xf32>
    %c0_3 = arith.constant 0 : index
    %c0_4 = arith.constant 0 : index
    %3 = vector.load %arg3[%c0_3, %c0_4] : memref<1x128xf32, #tpu.memory_space<vmem>>, vector<1x128xf32>
    %4 = vector.broadcast %3 : vector<1x128xf32> to vector<64x128xf32>
    %5 = arith.addf %2, %4 : vector<64x128xf32>
    %c0_5 = arith.constant 0 : index
    %c0_6 = arith.constant 0 : index
    %6 = vector.load %arg4[%c0_5, %c0_6] : memref<64x128xf32, #tpu.memory_space<vmem>>, vector<64x128xf32>
    tpu.vector_store %arg4[%c0_5, %c0_6], %5 {strides = array<i32>} : memref<64x128xf32, #tpu.memory_space<vmem>>, vector<64x128xf32>,
    return
  }
  func.func @transform_0(%arg0: i32) -> (i32, i32) {
    %c0_i32 = arith.constant 0 : i32
    %c0_i32_0 = arith.constant 0 : i32
    return %arg0, %c0_i32 : i32, i32
  }
  func.func @transform_1(%arg0: i32) -> (i32, i32) {
    %c0_i32 = arith.constant 0 : i32
    %c0_i32_0 = arith.constant 0 : i32
    %c0_i32_1 = arith.constant 0 : i32
    return %c0_i32, %c0_i32_0 : i32, i32
  }
  func.func @transform_2(%arg0: i32) -> (i32, i32) {
    %c0_i32 = arith.constant 0 : i32
    %c0_i32_0 = arith.constant 0 : i32
    %c0_i32_1 = arith.constant 0 : i32
    return %c0_i32, %c0_i32_0 : i32, i32
  }
  func.func @transform_3(%arg0: i32) -> (i32, i32) {
    %c0_i32 = arith.constant 0 : i32
    %c0_i32_0 = arith.constant 0 : i32
    return %arg0, %c0_i32 : i32, i32
  }
}

</mosaic_0001>

<llo_original>
// kernel: tpu_custom_call.1
$region0: #{tpu_custom_call.1}
  #allocation0 [shape = 'u32[]', space=smem, size = 0x4, offset = 0x4, fixed_abs, tag = 'smem constant byte address 0x4 - core index']
  #allocation1 [shape = 'u32[72,128]{1,0:T(1,128)}', space=vmem, size = 0x9000, scoped, tag = 'internal scratch']
  %s0 = inlined_call_operand.hbm [shape: f32[64,128], index: 0, kind: input, shape index: {}]
  %s1 = inlined_call_operand.hbm [shape: f32[128,128], index: 1, kind: input, shape index: {}]
  %s2 = inlined_call_operand.vmem [shape: f32[1,128], index: 2, kind: input, shape index: {}]
  %s3 = inlined_call_operand.hbm [shape: f32[64,128], index: 3, kind: output, shape index: {}]
  %s4 = sld [smem:[#allocation0]]
  $region30: #{tpu_custom_call.1} parent=0
    _
  %s6 = ssub.s32 1, %s4
  %s7 = scalar_select 0, %s6, %s4
  $region1: #{tpu_custom_call.1} parent=0
    #allocation2 [shape = 'u8[32768]{0}', space=vmem, size = 0x8000, scoped, tag = 'input window, operand 0, single buffered']
    #allocation3 [shape = 's32[1]{0}', space=sflag, size = 0x4, scoped, tag = 'scoped memory for tpu_custom_call.1']
    #allocation4 [shape = 's32[1]{0}', space=sflag, size = 0x4, scoped, tag = 'scoped memory for tpu_custom_call.1']
    #allocation5 [shape = 'u8[65536]{0}', space=vmem, size = 0x10000, scoped, tag = 'input window, operand 1, single buffered']
    #allocation6 [shape = 's32[1]{0}', space=sflag, size = 0x4, scoped, tag = 'scoped memory for tpu_custom_call.1']
    #allocation7 [shape = 'u8[32768]{0}', space=vmem, size = 0x8000, scoped, tag = 'output window, operand 0, single buffered']
    %8 = vsyncpa [#allocation3], 0
    %9 = vsyncpa [#allocation6], 0
    %10 = vsyncpa [#allocation4], 0
    // Predicated region
    $region2: #{tpu_custom_call.1} parent=1 // pred_check
      _
    $region3: #{tpu_custom_call.1} parent=1 // pred_check_branch
      %12 = sbr.rel (0) target = $region5
    $region4: #{tpu_custom_call.1} parent=1 // pred_region
      %14 = vsyncadd [#allocation3], 0
      %s15 = sshll.u32 %s0, 4
      %s16 = int_to_ptr.hbm [resolvable:$true] %s15
      %s17 = sshll.u32 [#allocation2], 4
      %s18 = int_to_ptr.vmem [resolvable:$true] %s17
      %23 = dma.hbm_to_vmem [thread:$0]  %s16, 1024, %s18, [#allocation3], 128, 128, 8
    $region5: #{tpu_custom_call.1} parent=1 // pred_fallthru
      _
    // Predicated region
    $region6: #{tpu_custom_call.1} parent=1 // pred_check
      _
    $region7: #{tpu_custom_call.1} parent=1 // pred_check_branch
      %25 = sbr.rel (0) target = $region9
    $region8: #{tpu_custom_call.1} parent=1 // pred_region
      %27 = vsyncadd [#allocation6], 0
      %s28 = sshll.u32 %s1, 4
      %s29 = int_to_ptr.hbm [resolvable:$true] %s28
      %s30 = sshll.u32 [#allocation5], 4
      %s31 = int_to_ptr.vmem [resolvable:$true] %s30
      %36 = dma.hbm_to_vmem [thread:$0]  %s29, 2048, %s31, [#allocation6], 128, 128, 8
    $region9: #{tpu_custom_call.1} parent=1 // pred_fallthru
      _
    // Predicated region
    $region10: #{tpu_custom_call.1} parent=1 // pred_check
      _
    $region11: #{tpu_custom_call.1} parent=1 // pred_check_branch
      %38 = sbr.rel (0) target = $region13
    $region12: #{tpu_custom_call.1} parent=1 // pred_region
      _
    $region13: #{tpu_custom_call.1} parent=1 // pred_fallthru
      _
    // Predicated region
    $region14: #{tpu_custom_call.1} parent=1 // pred_check
      _
    $region15: #{tpu_custom_call.1} parent=1 // pred_check_branch
      %40 = sbr.rel (0) target = $region17
    $region16: #{tpu_custom_call.1} parent=1 // pred_region
      %42 = dma.done [#allocation3], 1024
    $region17: #{tpu_custom_call.1} parent=1 // pred_fallthru
      _
    // Predicated region
    $region18: #{tpu_custom_call.1} parent=1 // pred_check
      _
    $region19: #{tpu_custom_call.1} parent=1 // pred_check_branch
      %44 = sbr.rel (0) target = $region21
    $region20: #{tpu_custom_call.1} parent=1 // pred_region
      %46 = dma.done [#allocation6], 2048
    $region21: #{tpu_custom_call.1} parent=1 // pred_fallthru
      _
    %v47 = vld [vmem:[#allocation2] sm:$0xff]
    %v48 = vld [vmem:[#allocation2 + $0x8] sm:$0xff]
    %v49 = vld [vmem:[#allocation2 + $0x10] sm:$0xff]
    %v50 = vld [vmem:[#allocation2 + $0x18] sm:$0xff]
    %v51 = vld [vmem:[#allocation2 + $0x20] sm:$0xff]
    %v52 = vld [vmem:[#allocation2 + $0x28] sm:$0xff]
    %v53 = vld [vmem:[#allocation2 + $0x30] sm:$0xff]
    %v54 = vld [vmem:[#allocation2 + $0x38] sm:$0xff]
    %v55 = vld [vmem:[#allocation5] sm:$0xff]
    %v56 = vld [vmem:[#allocation5 + $0x8] sm:$0xff]
    %v57 = vld [vmem:[#allocation5 + $0x10] sm:$0xff]
    %v58 = vld [vmem:[#allocation5 + $0x18] sm:$0xff]
    %v59 = vld [vmem:[#allocation5 + $0x20] sm:$0xff]
    %v60 = vld [vmem:[#allocation5 + $0x28] sm:$0xff]
    %v61 = vld [vmem:[#allocation5 + $0x30] sm:$0xff]
    %v62 = vld [vmem:[#allocation5 + $0x38] sm:$0xff]
    %v63 = vld [vmem:[#allocation5 + $0x40] sm:$0xff]
    %v64 = vld [vmem:[#allocation5 + $0x48] sm:$0xff]
    %v65 = vld [vmem:[#allocation5 + $0x50] sm:$0xff]
    %v66 = vld [vmem:[#allocation5 + $0x58] sm:$0xff]
    %v67 = vld [vmem:[#allocation5 + $0x60] sm:$0xff]
    %v68 = vld [vmem:[#allocation5 + $0x68] sm:$0xff]
    %v69 = vld [vmem:[#allocation5 + $0x70] sm:$0xff]
    %v70 = vld [vmem:[#allocation5 + $0x78] sm:$0xff]
    %v71 = vld [vmem:[%s2] sm:$0x1]
    %v73 = vperm.slane %v71, 0
    %75 = vmatpush.msra.mxu0 %v70
    %76 = vmatpush.msra.mxu0 %v69
    %77 = vmatpush.msra.mxu0 %v68
    %78 = vmatpush.msra.mxu0 %v67
    %79 = vmatpush.msra.mxu0 %v66
    %80 = vmatpush.msra.mxu0 %v65
    %81 = vmatpush.msra.mxu0 %v64
    %82 = vmatpush.msra.mxu0 %v63
    %83 = vmatpush.msra.mxu0 %v62
    %84 = vmatpush.msra.mxu0 %v61
    %85 = vmatpush.msra.mxu0 %v60
    %86 = vmatpush.msra.mxu0 %v59
    %87 = vmatpush.msra.mxu0 %v58
    %88 = vmatpush.msra.mxu0 %v57
    %89 = vmatpush.msra.mxu0 %v56
    %90 = vmatpush.msra.mxu0 %v55
    %91 = vmatmul.f32.gmra.mxu0 %v47
    %v92 = vpop.f32.mrf.mxu0
    %v93 = vadd.f32 %v73, %v92
    %94 = vmatmul.f32.gmra.mxu0 %v48
    %v95 = vpop.f32.mrf.mxu0
    %v96 = vadd.f32 %v73, %v95
    %97 = vmatmul.f32.gmra.mxu0 %v49
    %v98 = vpop.f32.mrf.mxu0
    %v99 = vadd.f32 %v73, %v98
    %100 = vmatmul.f32.gmra.mxu0 %v50
    %v101 = vpop.f32.mrf.mxu0
    %v102 = vadd.f32 %v73, %v101
    %103 = vmatmul.f32.gmra.mxu0 %v51
    %v104 = vpop.f32.mrf.mxu0
    %v105 = vadd.f32 %v73, %v104
    %106 = vmatmul.f32.gmra.mxu0 %v52
    %v107 = vpop.f32.mrf.mxu0
    %v108 = vadd.f32 %v73, %v107
    %109 = vmatmul.f32.gmra.mxu0 %v53
    %v110 = vpop.f32.mrf.mxu0
    %v111 = vadd.f32 %v73, %v110
    %112 = vmatmul.f32.gmra.mxu0 %v54
    %v113 = vpop.f32.mrf.mxu0
    %v114 = vadd.f32 %v73, %v113
    %115 = vdwg.mxu0
    %116 = vst [vmem:[#allocation7] sm:$0xff] %v93
    %117 = vst [vmem:[#allocation7 + $0x8] sm:$0xff] %v96
    %118 = vst [vmem:[#allocation7 + $0x10] sm:$0xff] %v99
    %119 = vst [vmem:[#allocation7 + $0x18] sm:$0xff] %v102
    %120 = vst [vmem:[#allocation7 + $0x20] sm:$0xff] %v105
    %121 = vst [vmem:[#allocation7 + $0x28] sm:$0xff] %v108
    %122 = vst [vmem:[#allocation7 + $0x30] sm:$0xff] %v111
    %123 = vst [vmem:[#allocation7 + $0x38] sm:$0xff] %v114
    // Predicated region
    $region22: #{tpu_custom_call.1} parent=1 // pred_check
      _
    $region23: #{tpu_custom_call.1} parent=1 // pred_check_branch
      %125 = sbr.rel (0) target = $region25
    $region24: #{tpu_custom_call.1} parent=1 // pred_region
      %127 = vsyncadd [#allocation4], 0
      %s128 = sshll.u32 [#allocation7], 4
      %s129 = int_to_ptr.vmem [resolvable:$true] %s128
      %s130 = sshll.u32 %s3, 4
      %s131 = int_to_ptr.hbm [resolvable:$true] %s130
      %136 = dma.vmem_to_hbm [thread:$0]  %s129, 1024, %s131, [#allocation4], 128, 128, 8
    $region25: #{tpu_custom_call.1} parent=1 // pred_fallthru
      _
    // Predicated region
    $region26: #{tpu_custom_call.1} parent=1 // pred_check
      _
    $region27: #{tpu_custom_call.1} parent=1 // pred_check_branch
      %138 = sbr.rel (0) target = $region29
    $region28: #{tpu_custom_call.1} parent=1 // pred_region
      %140 = dma.done [#allocation4], 1024
    $region29: #{tpu_custom_call.1} parent=1 // pred_fallthru
      _
    %141 = vsyncpa [#allocation3], 1
    %142 = vsyncpa [#allocation6], 1
    %143 = vsyncpa [#allocation4], 1

</llo_original>
